<compile_context>
chip_gen: v7x
topology: tpu7x:2x2x1
jax: 0.10.0
libtpu: 0.0.40
codegen_flags: <defaults>
</compile_context>

<pallas_src>
import jax
import jax.numpy as jnp
from jax.experimental import pallas as pl
from jax.experimental.pallas import tpu as pltpu


def _cross_stitch_kernel(a_ref, *refs):
    # a_ref : SMEM, shape (n,) float32 mixing weights
    # refs  : (x_0, ..., x_{n-1}, out), each a (tile_r, cols) VMEM tile
    *x_refs, o_ref = refs
    n = len(x_refs)
    # Hoist the scalar (SMEM) reads before the vector loop.
    w = [a_ref[i] for i in range(n)]
    acc = w[0] * x_refs[0][...].astype(jnp.float32)
    for i in range(1, n):  # static, tiny trip-count
        acc = acc + w[i] * x_refs[i][...].astype(jnp.float32)
    o_ref[...] = acc.astype(o_ref.dtype)


def _vmem_config():
    """(working-set budget bytes, vmem_limit_bytes), tuned per TPU generation."""
    cap = None
    try:
        cap = int(getattr(pltpu.get_tpu_info(), "vmem_capacity_bytes"))
    except Exception:
        cap = None
    if cap is not None and cap >= 100 * 1024 * 1024:
        # v5e / v6e: 128 MiB physical VMEM -> bigger tiles, generous limit.
        return 64 * 1024 * 1024, 96 * 1024 * 1024
    # v7x (64 MiB per TensorCore) or unknown: leave the compiler headroom.
    return 24 * 1024 * 1024, 48 * 1024 * 1024


def _choose_cols(total):
    """Largest lane-dense width (multiple of 128) dividing `total` (128 | total)."""
    fallback = None
    for cols in (4096, 2048, 1024, 512, 256, 128):
        if total % cols == 0:
            if total // cols >= 8:
                return cols
            if fallback is None:
                fallback = cols
    return fallback  # total % 128 == 0 guarantees this is not None


def _pick_tile_rows(rows, cols, n_streams, itemsize, sub, budget_bytes,
                    max_rows=2048):
    """Row tile: multiple of `sub` (or full `rows`), sized for the VMEM budget.

    Notes:
      * The budget is a target, not a hard contract: the floor is one
        sublane-row (`sub` rows), so a tiny budget can be exceeded;
        vmem_limit_bytes provides the real slack.
      * Exact divisors of `rows` are preferred (no ragged edge) but only down
        to cap//2 -- never degenerate to `sub`-row tiles, which would make the
        ~0.35 us per-grid-step overhead dominate the DMA time.
      * The tile is capped so the grid has >= 2 steps whenever rows allow it,
        so v7x's two TensorCores can both issue DMAs on the "parallel" axis.
    """
    if rows <= sub:
        return rows  # full second-to-last dim is always legal
    cap = budget_bytes // (n_streams * 2 * cols * itemsize)
    cap = max(sub, min((cap // sub) * sub, max_rows))
    if rows >= 2 * sub:
        half = ((rows // 2) // sub) * sub
        cap = min(cap, max(sub, half))
    if rows <= cap:
        return rows
    lo = max(sub, ((cap // 2) // sub) * sub)
    for t in range(cap, lo - 1, -sub):  # exact divisor only if not much smaller
        if rows % t == 0:
            return t
    return cap  # ragged last block; Pallas masks the edge stores


def single_sided_asymmetric_cross_stitch(features, a, *, vmem_budget_bytes=None):
    """Weighted sum of feature maps: out = sum_i a[i] * features[i].

    features: list of N arrays with identical shape/dtype (e.g. [B, C, H, W]).
    a:        [N] float32 mixing weights.
    """
    n = len(features)
    shape = tuple(int(d) for d in features[0].shape)
    dtype = features[0].dtype
    for f in features:
        assert tuple(int(d) for d in f.shape) == shape and f.dtype == dtype
    a = jnp.asarray(a, jnp.float32)
    assert a.shape == (n,)

    total = 1
    for d in shape:
        total *= d

    itemsize = jnp.dtype(dtype).itemsize
    sub = max(8, 32 // itemsize)  # sublane multiple: 8 (f32), 16 (bf16), 32 (int8)

    auto_budget, vmem_limit = _vmem_config()
    budget = auto_budget if vmem_budget_bytes is None else vmem_budget_bytes

    if total % 128 == 0:
        cols = _choose_cols(total)  # lane-dense, unmasked stores
    else:
        # Unaligned total: never pad/copy in HBM. Use a suffix product of the
        # original dims as the last axis so the reshape stays a free view and
        # the block's last dim equals the full array dim ((8,128)-rule safe).
        # TODO(synk): if cols ends up < 128 the tail stores are masked
        # (partial-lane vst); still strictly cheaper than an HBM padding pass.
        cols, k = 1, len(shape)
        while k > 0 and cols < 128:
            k -= 1
            cols *= shape[k]
        cols = max(cols, 1)
    rows = total // cols

    tile_r = _pick_tile_rows(rows, cols, n + 1, itemsize, sub, budget)

    x2d = [jnp.reshape(f, (rows, cols)) for f in features]  # free views

    feat_spec = pl.BlockSpec((tile_r, cols), lambda r: (r, 0))
    grid = (pl.cdiv(rows, tile_r),)

    cost = pl.CostEstimate(
        flops=(2 * n - 1) * total,                 # n muls + (n-1) adds / elem
        transcendentals=0,
        bytes_accessed=(n + 1) * total * itemsize,
    )

    out2d = pl.pallas_call(
        _cross_stitch_kernel,
        out_shape=jax.ShapeDtypeStruct((rows, cols), dtype),
        grid_spec=pltpu.PrefetchScalarGridSpec(
            num_scalar_prefetch=0,
            grid=grid,
            in_specs=[pl.BlockSpec(memory_space=pltpu.SMEM)]  # a: whole array in SMEM
                     + [feat_spec] * n,                        # one 2D spec per feature
            out_specs=feat_spec,
        ),
        compiler_params=pltpu.CompilerParams(
            dimension_semantics=("parallel",),     # shards grid steps across TCs
            vmem_limit_bytes=vmem_limit,
        ),
        cost_estimate=cost,
    )(a, *x2d)

    return out2d.reshape(shape)


def make_cross_stitch_weights(init_weights, in_channels, out_channels):
    """Deterministic parameter init mirroring the PyTorch __init__."""
    assert in_channels >= out_channels
    assert in_channels % out_channels == 0
    multiplier = in_channels // out_channels - 1
    vals = [init_weights[0]] + [init_weights[1] / float(multiplier)
                                for _ in range(int(multiplier))]
    return jnp.asarray(vals, dtype=jnp.float32)


if __name__ == "__main__":
    # Config mimicking cfg.nddr.INIT and channel counts.
    INIT = (0.9, 0.1)
    in_channels, out_channels = 16, 4          # -> 4 features, 4 mixing weights
    n_feats = in_channels // out_channels
    a = make_cross_stitch_weights(INIT, in_channels, out_channels)

    # Case 1: small module-sized example, 128-aligned total (lane-dense path).
    B, C, H, W = 2, 4, 16, 16
    keys = jax.random.split(jax.random.PRNGKey(0), n_feats)
    feats1 = [jax.random.normal(k, (B, C, H, W), dtype=jnp.float32) for k in keys]
    out1 = jax.block_until_ready(single_sided_asymmetric_cross_stitch(feats1, a))
    ref1 = sum(a[i] * feats1[i] for i in range(n_feats))
    assert out1.shape == (B, C, H, W)
    assert jnp.allclose(out1, ref1, atol=1e-5, rtol=1e-5), "aligned-case mismatch"

    # Case 2: larger case with a tiny VMEM budget -> multi-step pipelined grid.
    B2, C2, H2, W2 = 2, 8, 64, 64
    keys2 = jax.random.split(jax.random.PRNGKey(0), n_feats)
    feats2 = [jax.random.normal(k, (B2, C2, H2, W2), dtype=jnp.float32)
              for k in keys2]
    out2 = jax.block_until_ready(
        single_sided_asymmetric_cross_stitch(feats2, a,
                                             vmem_budget_bytes=256 * 1024))
    ref2 = sum(a[i] * feats2[i] for i in range(n_feats))
    assert out2.shape == (B2, C2, H2, W2)
    assert jnp.allclose(out2, ref2, atol=1e-5, rtol=1e-5), "tiled-case mismatch"

    # Case 3: total % 128 != 0 -> no-pad unaligned path with a ragged final
    # block (masked edge stores), never copying the inputs in HBM.
    B3, C3, H3, W3 = 5, 3, 20, 20              # total = 6000, not 128-aligned
    keys3 = jax.random.split(jax.random.PRNGKey(0), n_feats)
    feats3 = [jax.random.normal(k, (B3, C3, H3, W3), dtype=jnp.float32)
              for k in keys3]
    out3 = jax.block_until_ready(
        single_sided_asymmetric_cross_stitch(feats3, a,
                                             vmem_budget_bytes=128 * 1024))
    ref3 = sum(a[i] * feats3[i] for i in range(n_feats))
    assert out3.shape == (B3, C3, H3, W3)
    assert jnp.allclose(out3, ref3, atol=1e-5, rtol=1e-5), "unaligned-case mismatch"

    print("KERNEL_OK")
</pallas_src>

<mosaic_0001>
module attributes {stable_mosaic.version = 11 : i64} {
  func.func @_cross_stitch_kernel(%arg0: i32, %arg1: memref<4xf32, #tpu.memory_space<smem>>, %arg2: memref<8x256xf32, #tpu.memory_space<vmem>>, %arg3: memref<8x256xf32, #tpu.memory_space<vmem>>, %arg4: memref<8x256xf32, #tpu.memory_space<vmem>>, %arg5: memref<8x256xf32, #tpu.memory_space<vmem>>, %arg6: memref<8x256xf32, #tpu.memory_space<vmem>>) attributes {dimension_semantics = [#tpu.dimension_semantics<parallel>], iteration_bounds = array<i64: 1>, scalar_prefetch = 0 : i64, scratch_operands = 0 : i64, tpu.core_type = #tpu.core_type<tc>, window_params = [{transform_indices = @transform_0, window_bounds = array<i64: 4>}, {transform_indices = @transform_1, window_bounds = array<i64: 8, 256>}, {transform_indices = @transform_2, window_bounds = array<i64: 8, 256>}, {transform_indices = @transform_3, window_bounds = array<i64: 8, 256>}, {transform_indices = @transform_4, window_bounds = array<i64: 8, 256>}, {transform_indices = @transform_5, window_bounds = array<i64: 8, 256>}]} {
    %c0 = arith.constant 0 : index
    %0 = memref.load %arg1[%c0] : memref<4xf32, #tpu.memory_space<smem>>
    %c1 = arith.constant 1 : index
    %1 = memref.load %arg1[%c1] : memref<4xf32, #tpu.memory_space<smem>>
    %c2 = arith.constant 2 : index
    %2 = memref.load %arg1[%c2] : memref<4xf32, #tpu.memory_space<smem>>
    %c3 = arith.constant 3 : index
    %3 = memref.load %arg1[%c3] : memref<4xf32, #tpu.memory_space<smem>>
    %c0_0 = arith.constant 0 : index
    %c0_1 = arith.constant 0 : index
    %4 = vector.load %arg2[%c0_0, %c0_1] : memref<8x256xf32, #tpu.memory_space<vmem>>, vector<8x256xf32>
    %5 = vector.broadcast %0 : f32 to vector<8x256xf32>
    %6 = arith.mulf %5, %4 : vector<8x256xf32>
    %c0_2 = arith.constant 0 : index
    %c0_3 = arith.constant 0 : index
    %7 = vector.load %arg3[%c0_2, %c0_3] : memref<8x256xf32, #tpu.memory_space<vmem>>, vector<8x256xf32>
    %8 = vector.broadcast %1 : f32 to vector<8x256xf32>
    %9 = arith.mulf %8, %7 : vector<8x256xf32>
    %10 = arith.addf %6, %9 : vector<8x256xf32>
    %c0_4 = arith.constant 0 : index
    %c0_5 = arith.constant 0 : index
    %11 = vector.load %arg4[%c0_4, %c0_5] : memref<8x256xf32, #tpu.memory_space<vmem>>, vector<8x256xf32>
    %12 = vector.broadcast %2 : f32 to vector<8x256xf32>
    %13 = arith.mulf %12, %11 : vector<8x256xf32>
    %14 = arith.addf %10, %13 : vector<8x256xf32>
    %c0_6 = arith.constant 0 : index
    %c0_7 = arith.constant 0 : index
    %15 = vector.load %arg5[%c0_6, %c0_7] : memref<8x256xf32, #tpu.memory_space<vmem>>, vector<8x256xf32>
    %16 = vector.broadcast %3 : f32 to vector<8x256xf32>
    %17 = arith.mulf %16, %15 : vector<8x256xf32>
    %18 = arith.addf %14, %17 : vector<8x256xf32>
    %c0_8 = arith.constant 0 : index
    %c0_9 = arith.constant 0 : index
    %19 = vector.load %arg6[%c0_8, %c0_9] : memref<8x256xf32, #tpu.memory_space<vmem>>, vector<8x256xf32>
    tpu.vector_store %arg6[%c0_8, %c0_9], %18 {strides = array<i32>} : memref<8x256xf32, #tpu.memory_space<vmem>>, vector<8x256xf32>,
    return
  }
  func.func @transform_0(%arg0: i32) -> i32 {
    %c0_i32 = arith.constant 0 : i32
    %c0_i32_0 = arith.constant 0 : i32
    return %c0_i32 : i32
  }
  func.func @transform_1(%arg0: i32) -> (i32, i32) {
    %c0_i32 = arith.constant 0 : i32
    %c0_i32_0 = arith.constant 0 : i32
    return %arg0, %c0_i32 : i32, i32
  }
  func.func @transform_2(%arg0: i32) -> (i32, i32) {
    %c0_i32 = arith.constant 0 : i32
    %c0_i32_0 = arith.constant 0 : i32
    return %arg0, %c0_i32 : i32, i32
  }
  func.func @transform_3(%arg0: i32) -> (i32, i32) {
    %c0_i32 = arith.constant 0 : i32
    %c0_i32_0 = arith.constant 0 : i32
    return %arg0, %c0_i32 : i32, i32
  }
  func.func @transform_4(%arg0: i32) -> (i32, i32) {
    %c0_i32 = arith.constant 0 : i32
    %c0_i32_0 = arith.constant 0 : i32
    return %arg0, %c0_i32 : i32, i32
  }
  func.func @transform_5(%arg0: i32) -> (i32, i32) {
    %c0_i32 = arith.constant 0 : i32
    %c0_i32_0 = arith.constant 0 : i32
    return %arg0, %c0_i32 : i32, i32
  }
}

</mosaic_0001>

<llo_original>
// kernel: tpu_custom_call.1
$region0: #{tpu_custom_call.1}
  #allocation0 [shape = 'u32[]', space=smem, size = 0x4, offset = 0x4, fixed_abs, tag = 'smem constant byte address 0x4 - core index']
  #allocation1 [shape = 'u32[144,128]{1,0:T(1,128)}', space=vmem, size = 0x12000, scoped, tag = 'internal scratch']
  %s0 = inlined_call_operand.hbm [shape: f32[4], index: 0, kind: input, shape index: {}]
  %s1 = inlined_call_operand.hbm [shape: f32[8,256], index: 1, kind: input, shape index: {}]
  %s2 = inlined_call_operand.hbm [shape: f32[8,256], index: 2, kind: input, shape index: {}]
  %s3 = inlined_call_operand.hbm [shape: f32[8,256], index: 3, kind: input, shape index: {}]
  %s4 = inlined_call_operand.hbm [shape: f32[8,256], index: 4, kind: input, shape index: {}]
  %s5 = inlined_call_operand.hbm [shape: f32[8,256], index: 5, kind: output, shape index: {}]
  %s6 = sld [smem:[#allocation0]]
  $region50: #{tpu_custom_call.1} parent=0
    _
  %s8 = ssub.s32 1, %s6
  %s9 = scalar_select 0, %s8, %s6
  $region1: #{tpu_custom_call.1} parent=0
    #allocation2 [shape = 'u8[512]{0}', space=smem, size = 0x200, scoped, tag = 'input window, operand 0, single buffered']
    #allocation3 [shape = 's32[1]{0}', space=sflag, size = 0x4, scoped, tag = 'scoped memory for tpu_custom_call.1']
    #allocation4 [shape = 's32[1]{0}', space=sflag, size = 0x4, scoped, tag = 'scoped memory for tpu_custom_call.1']
    #allocation5 [shape = 's32[1]{0}', space=sflag, size = 0x4, scoped, tag = 'scoped memory for tpu_custom_call.1']
    #allocation6 [shape = 'u8[8192]{0}', space=vmem, size = 0x2000, scoped, tag = 'input window, operand 1, single buffered']
    #allocation7 [shape = 'u8[8192]{0}', space=vmem, size = 0x2000, scoped, tag = 'input window, operand 2, single buffered']
    #allocation8 [shape = 's32[1]{0}', space=sflag, size = 0x4, scoped, tag = 'scoped memory for tpu_custom_call.1']
    #allocation9 [shape = 'u8[8192]{0}', space=vmem, size = 0x2000, scoped, tag = 'input window, operand 3, single buffered']
    #allocation10 [shape = 'u8[8192]{0}', space=vmem, size = 0x2000, scoped, tag = 'input window, operand 4, single buffered']
    #allocation11 [shape = 's32[1]{0}', space=sflag, size = 0x4, scoped, tag = 'scoped memory for tpu_custom_call.1']
    #allocation12 [shape = 'u8[8192]{0}', space=vmem, size = 0x2000, scoped, tag = 'output window, operand 0, single buffered']
    %10 = vsyncpa [#allocation5], 0
    %11 = vsyncpa [#allocation3], 0
    %12 = vsyncpa [#allocation8], 0
    %13 = vsyncpa [#allocation11], 0
    %14 = vsyncpa [#allocation4], 0
    // Predicated region
    $region2: #{tpu_custom_call.1} parent=1 // pred_check
      _
    $region3: #{tpu_custom_call.1} parent=1 // pred_check_branch
      %16 = sbr.rel (0) target = $region5
    $region4: #{tpu_custom_call.1} parent=1 // pred_region
      %s18 = ssub.s32 16, 16
      %19 = vsyncadd [#allocation5], %s18
      %22 = dma.hbm_to_smem %s0, 16, [#allocation2], [#allocation5]
    $region5: #{tpu_custom_call.1} parent=1 // pred_fallthru
      _
    // Predicated region
    $region6: #{tpu_custom_call.1} parent=1 // pred_check
      _
    $region7: #{tpu_custom_call.1} parent=1 // pred_check_branch
      %24 = sbr.rel (0) target = $region9
    $region8: #{tpu_custom_call.1} parent=1 // pred_region
      %s26 = ssub.s32 256, 256
      %27 = vsyncadd [#allocation3], %s26
      %s29 = sshll.u32 [#allocation6], 4
      %s30 = int_to_ptr.vmem [resolvable:$true] %s29
      %32 = dma.hbm_to_vmem [thread:$0]  %s1, 256, %s30, [#allocation3]
    $region9: #{tpu_custom_call.1} parent=1 // pred_fallthru
      _
    // Predicated region
    $region10: #{tpu_custom_call.1} parent=1 // pred_check
      _
    $region11: #{tpu_custom_call.1} parent=1 // pred_check_branch
      %34 = sbr.rel (0) target = $region13
    $region12: #{tpu_custom_call.1} parent=1 // pred_region
      %s36 = ssub.s32 256, 256
      %37 = vsyncadd [#allocation8], %s36
      %s39 = sshll.u32 [#allocation7], 4
      %s40 = int_to_ptr.vmem [resolvable:$true] %s39
      %42 = dma.hbm_to_vmem [thread:$0]  %s2, 256, %s40, [#allocation8]
    $region13: #{tpu_custom_call.1} parent=1 // pred_fallthru
      _
    // Predicated region
    $region14: #{tpu_custom_call.1} parent=1 // pred_check
      _
    $region15: #{tpu_custom_call.1} parent=1 // pred_check_branch
      %44 = sbr.rel (0) target = $region17
    $region16: #{tpu_custom_call.1} parent=1 // pred_region
      %s46 = ssub.s32 256, 256
      %47 = vsyncadd [#allocation8], %s46
      %s49 = sshll.u32 [#allocation9], 4
      %s50 = int_to_ptr.vmem [resolvable:$true] %s49
      %52 = dma.hbm_to_vmem [thread:$0]  %s3, 256, %s50, [#allocation8]
    $region17: #{tpu_custom_call.1} parent=1 // pred_fallthru
      _
    // Predicated region
    $region18: #{tpu_custom_call.1} parent=1 // pred_check
      _
    $region19: #{tpu_custom_call.1} parent=1 // pred_check_branch
      %54 = sbr.rel (0) target = $region21
    $region20: #{tpu_custom_call.1} parent=1 // pred_region
      %s56 = ssub.s32 256, 256
      %57 = vsyncadd [#allocation11], %s56
      %s59 = sshll.u32 [#allocation10], 4
      %s60 = int_to_ptr.vmem [resolvable:$true] %s59
      %62 = dma.hbm_to_vmem [thread:$0]  %s4, 256, %s60, [#allocation11]
    $region21: #{tpu_custom_call.1} parent=1 // pred_fallthru
      _
    // Predicated region
    $region22: #{tpu_custom_call.1} parent=1 // pred_check
      _
    $region23: #{tpu_custom_call.1} parent=1 // pred_check_branch
      %64 = sbr.rel (0) target = $region25
    $region24: #{tpu_custom_call.1} parent=1 // pred_region
      %65 = dma.done [#allocation5], 16
    $region25: #{tpu_custom_call.1} parent=1 // pred_fallthru
      _
    // Predicated region
    $region26: #{tpu_custom_call.1} parent=1 // pred_check
      _
    $region27: #{tpu_custom_call.1} parent=1 // pred_check_branch
      %67 = sbr.rel (0) target = $region29
    $region28: #{tpu_custom_call.1} parent=1 // pred_region
      %68 = dma.done [#allocation3], 256
    $region29: #{tpu_custom_call.1} parent=1 // pred_fallthru
      _
    // Predicated region
    $region30: #{tpu_custom_call.1} parent=1 // pred_check
      _
    $region31: #{tpu_custom_call.1} parent=1 // pred_check_branch
      %70 = sbr.rel (0) target = $region33
    $region32: #{tpu_custom_call.1} parent=1 // pred_region
      %71 = dma.done [#allocation8], 256
    $region33: #{tpu_custom_call.1} parent=1 // pred_fallthru
      _
    // Predicated region
    $region34: #{tpu_custom_call.1} parent=1 // pred_check
      _
    $region35: #{tpu_custom_call.1} parent=1 // pred_check_branch
      %73 = sbr.rel (0) target = $region37
    $region36: #{tpu_custom_call.1} parent=1 // pred_region
      %74 = dma.done [#allocation8], 256
    $region37: #{tpu_custom_call.1} parent=1 // pred_fallthru
      _
    // Predicated region
    $region38: #{tpu_custom_call.1} parent=1 // pred_check
      _
    $region39: #{tpu_custom_call.1} parent=1 // pred_check_branch
      %76 = sbr.rel (0) target = $region41
    $region40: #{tpu_custom_call.1} parent=1 // pred_region
      %77 = dma.done [#allocation11], 256
    $region41: #{tpu_custom_call.1} parent=1 // pred_fallthru
      _
    %78 = sfence
    %s79 = sld [smem:[#allocation2]]
    %s80 = sld [smem:[#allocation2 + $0x1]]
    %s81 = sld [smem:[#allocation2 + $0x2]]
    %s82 = sld [smem:[#allocation2 + $0x3]]
    %v83 = vld [vmem:[#allocation6] sm:$0xff]
    %v84 = vld [vmem:[#allocation6 + $0x8] sm:$0xff]
    %v85 = vstv %s79
    %v86 = vmul.f32 %v85, %v83
    %v87 = vmul.f32 %v85, %v84
    %v88 = vld [vmem:[#allocation7] sm:$0xff]
    %v89 = vld [vmem:[#allocation7 + $0x8] sm:$0xff]
    %v90 = vstv %s80
    %v91 = vmul.f32 %v90, %v88
    %v92 = vmul.f32 %v90, %v89
    %v93 = vadd.f32 %v86, %v91
    %v94 = vadd.f32 %v87, %v92
    %v95 = vld [vmem:[#allocation9] sm:$0xff]
    %v96 = vld [vmem:[#allocation9 + $0x8] sm:$0xff]
    %v97 = vstv %s81
    %v98 = vmul.f32 %v97, %v95
    %v99 = vmul.f32 %v97, %v96
    %v100 = vadd.f32 %v93, %v98
    %v101 = vadd.f32 %v94, %v99
    %v102 = vld [vmem:[#allocation10] sm:$0xff]
    %v103 = vld [vmem:[#allocation10 + $0x8] sm:$0xff]
    %v104 = vstv %s82
    %v105 = vmul.f32 %v104, %v102
    %v106 = vmul.f32 %v104, %v103
    %v107 = vadd.f32 %v100, %v105
    %v108 = vadd.f32 %v101, %v106
    %109 = vst [vmem:[#allocation12] sm:$0xff] %v107
    %110 = vst [vmem:[#allocation12 + $0x8] sm:$0xff] %v108
    // Predicated region
    $region42: #{tpu_custom_call.1} parent=1 // pred_check
      _
    $region43: #{tpu_custom_call.1} parent=1 // pred_check_branch
      %112 = sbr.rel (0) target = $region45
    $region44: #{tpu_custom_call.1} parent=1 // pred_region
      %s114 = ssub.s32 256, 256
      %115 = vsyncadd [#allocation4], %s114
      %s117 = sshll.u32 [#allocation12], 4
      %s118 = int_to_ptr.vmem [resolvable:$true] %s117
      %120 = dma.vmem_to_hbm [thread:$0]  %s118, 256, %s5, [#allocation4]
    $region45: #{tpu_custom_call.1} parent=1 // pred_fallthru
      _
    // Predicated region
    $region46: #{tpu_custom_call.1} parent=1 // pred_check
      _
    $region47: #{tpu_custom_call.1} parent=1 // pred_check_branch
      %122 = sbr.rel (0) target = $region49
    $region48: #{tpu_custom_call.1} parent=1 // pred_region
      %123 = dma.done [#allocation4], 256
    $region49: #{tpu_custom_call.1} parent=1 // pred_fallthru
      _
    %124 = vsyncpa [#allocation3], 1
    %125 = vsyncpa [#allocation8], 1
    %126 = vsyncpa [#allocation11], 1
    %127 = vsyncpa [#allocation4], 1
    %128 = vsyncpa [#allocation5], 1

</llo_original>
